<compile_context>
chip_gen: v7x
topology: tpu7x:2x2x1
jax: 0.10.0
libtpu: 0.0.40
codegen_flags: <defaults>
</compile_context>

<pallas_src>
import functools

import jax
import jax.numpy as jnp
from jax.experimental import pallas as pl
from jax.experimental.pallas import tpu as pltpu


def _accuracy_kernel(tgt_ref, logits_ref, out_ref, *,
                     pad_idx, n_rows, chunk, num_chunks, unroll):
    """One grid step: a (TN, V) logits block + (TN, 1) target block.

    Loops over CHUNK-row sub-chunks of the block (bounds live compute
    temporaries) and writes the two partial counts into a fused, lane-dense
    (1, 2, 128) int32 output block: sublane 0 = correct, sublane 1 = total.
    No cross-step carried state -> the grid axis can be "parallel".
    """
    step = pl.program_id(0)
    tn, vocab = logits_ref.shape
    base = step * tn

    # (1, V) lane-index iota, broadcast against each chunk (avoids a full
    # (TN, V) int32 materialization per grid step).
    lane_idx = jax.lax.broadcasted_iota(jnp.int32, (1, vocab), 1)
    row_in_chunk = jax.lax.broadcasted_iota(jnp.int32, (chunk, 1), 0)

    def body(c, carry):
        correct_acc, total_acc = carry
        r0 = c * chunk
        if chunk % 8 == 0:
            r0 = pl.multiple_of(r0, chunk)
        x = logits_ref[pl.ds(r0, chunk), :]        # native dtype (bf16 stays packed)
        tgt = tgt_ref[pl.ds(r0, chunk), :]         # (chunk, 1) int32

        # First-occurrence argmax along the vocab (lane) axis, matching
        # torch.argmax / jnp.argmax tie-breaking.  max/compare stay in the
        # native logits dtype; only the index select/min is int32.
        # TODO(synk): an all-NaN row yields pred == vocab (always "wrong"),
        # whereas torch.argmax would return the NaN index — edge-case only.
        row_max = jnp.max(x, axis=-1, keepdims=True)                 # (chunk, 1)
        pred = jnp.min(
            jnp.where(x == row_max, lane_idx, jnp.int32(vocab)),
            axis=-1, keepdims=True)                                  # (chunk, 1) int32

        # Mask rows of the last (partial) grid block that fall past N.
        valid = (base + r0 + row_in_chunk) < n_rows
        non_pad = jnp.logical_and(tgt != jnp.int32(pad_idx), valid)
        corrects = jnp.logical_and(pred == tgt, non_pad)
        return (correct_acc + jnp.sum(corrects.astype(jnp.int32)),
                total_acc + jnp.sum(non_pad.astype(jnp.int32)))

    correct, total = jax.lax.fori_loop(
        0, num_chunks, body, (jnp.int32(0), jnp.int32(0)), unroll=unroll)

    out_ref[:, 0:1, :] = jnp.broadcast_to(correct, (1, 1, 128))
    out_ref[:, 1:2, :] = jnp.broadcast_to(total, (1, 1, 128))


def _vmem_capacity_bytes():
    """Per-core VMEM capacity; conservative 64 MiB (v7x per-TC) fallback."""
    try:
        info = pltpu.get_tpu_info()
        for attr in ("vmem_capacity_bytes", "vmem_bytes", "vmem_capacity"):
            val = getattr(info, attr, None)
            if val:
                return int(val)
    except Exception:
        pass
    return 64 * 1024 * 1024


def _choose_tiling(n_rows, vocab, itemsize, vmem_capacity,
                   block_rows=None, chunk_rows=None):
    """Return (tn, chunk) with chunk | tn.

    tn    : rows per DMA block (double-buffered by the BlockSpec pipeline) —
            the dominant lever for HBM streaming efficiency.
    chunk : rows per in-kernel compute sub-chunk — bounds live compute
            temporaries (int32 select result, masks) to ~4 MiB regardless
            of tn.
    """
    sub = 16 if itemsize < 4 else 8          # sublane granule (packed for <32-bit)

    if chunk_rows is not None:
        chunk = int(chunk_rows)
    else:
        # ~V*8 bytes/row of live temps; keep them to a few MiB.
        chunk = (4 * 1024 * 1024) // max(vocab * 8, 1)
        chunk = max(sub, min(256, (chunk // sub) * sub))

    if block_rows is not None:
        tn = int(block_rows)
    else:
        # Double-buffered native-dtype logits blocks within ~40% of VMEM;
        # the rest is left for temps, outputs and Mosaic internal scratch.
        input_budget = int(0.40 * vmem_capacity)
        tn = input_budget // max(2 * vocab * itemsize, 1)
        tn = max(chunk, min(1024, (tn // chunk) * chunk))
        # TODO(synk): for very large vocabularies (V >= ~256k) this floor can
        # exceed the VMEM budget; add a second, last ("arbitrary") grid axis
        # over V with running-max / running-argmin scratch so TN can stay in
        # the 128-512-row sweet spot.

    if tn >= n_rows:
        # Whole problem fits one block: single exact chunk, block dims equal
        # the full array dims (always a legal BlockSpec).
        return n_rows, n_rows

    chunk = min(chunk, tn)
    if tn % chunk:
        chunk = tn                            # keep the in-kernel loop exact
    return tn, chunk


def accuracy_metric(logits, target, pad_idx=0, *,
                    block_rows=None, chunk_rows=None):
    """Pallas implementation of AccuracyMetric.forward.

    logits: (B, S, V) float array (native dtype preserved, e.g. bf16)
    target: (B, S)    int array
    Returns (correct_count, total_count) as int32 device scalars.
    `block_rows` / `chunk_rows` are testing overrides (use sublane multiples).
    """
    B, S, V = logits.shape
    N = B * S
    logits_flat = logits.reshape(N, V)                     # keep native dtype
    target_flat = target.reshape(N, 1).astype(jnp.int32)

    vmem_cap = _vmem_capacity_bytes()
    tn, chunk = _choose_tiling(N, V, logits_flat.dtype.itemsize, vmem_cap,
                               block_rows=block_rows, chunk_rows=chunk_rows)
    num_blocks = -(-N // tn)                               # ceil div
    num_chunks = tn // chunk

    kernel = functools.partial(
        _accuracy_kernel, pad_idx=int(pad_idx), n_rows=N, chunk=chunk,
        num_chunks=num_chunks, unroll=(num_chunks <= 8))

    parts = pl.pallas_call(
        kernel,
        out_shape=jax.ShapeDtypeStruct((num_blocks, 2, 128), jnp.int32),
        grid_spec=pltpu.PrefetchScalarGridSpec(
            num_scalar_prefetch=0,
            grid=(num_blocks,),
            in_specs=[
                pl.BlockSpec((tn, 1), lambda i: (i, 0)),   # targets
                pl.BlockSpec((tn, V), lambda i: (i, 0)),   # logits (lane-dense)
            ],
            # Fused lane-dense per-block partials: [correct, total] x 128 lanes.
            out_specs=pl.BlockSpec((1, 2, 128), lambda i: (i, 0, 0)),
        ),
        compiler_params=pltpu.CompilerParams(
            dimension_semantics=("parallel",),             # megacore sharding
            vmem_limit_bytes=int(0.85 * vmem_cap),
        ),
    )(target_flat, logits_flat)

    correct = jnp.sum(parts[:, 0, 0])
    total = jnp.sum(parts[:, 1, 0])
    return correct, total


def _reference(logits, target, pad_idx=0):
    B, S, V = logits.shape
    lf = logits.reshape(B * S, V)
    tf = target.reshape(B * S)
    pred = jnp.argmax(lf, axis=1)
    non_pad = tf != pad_idx
    corrects = jnp.logical_and(pred == tf, non_pad)
    return int(jnp.sum(corrects)), int(jnp.sum(non_pad))


def _check(logits, target, pad_idx, **kw):
    correct, total = accuracy_metric(logits, target, pad_idx=pad_idx, **kw)
    jax.block_until_ready((correct, total))
    ref_c, ref_t = _reference(logits, target, pad_idx=pad_idx)
    assert int(correct) == ref_c, (int(correct), ref_c)
    assert int(total) == ref_t, (int(total), ref_t)


if __name__ == "__main__":
    key = jax.random.PRNGKey(0)
    pad_idx = 0

    # 1) f32 logits, single-block path (B=2, S=8, V=32).
    B, S, V = 2, 8, 32
    k1, k2, k3, k4 = jax.random.split(key, 4)
    logits = jax.random.normal(k1, (B, S, V), dtype=jnp.float32)
    target = jax.random.randint(k2, (B, S), 0, V, dtype=jnp.int32)
    target = target.at[0, :3].set(pad_idx)          # exercise the pad mask
    _check(logits, target, pad_idx)

    # 2) bf16 logits: native packed-dtype max/compare path (no f32 cast).
    _check(logits.astype(jnp.bfloat16), target, pad_idx)

    # 3) Multi-block grid with a partial tail block plus a multi-chunk
    #    in-kernel loop (N=21, TN=16, CHUNK=8) to exercise row masking.
    B2, S2 = 3, 7
    logits2 = jax.random.normal(k3, (B2, S2, V), dtype=jnp.float32)
    target2 = jax.random.randint(k4, (B2, S2), 0, V, dtype=jnp.int32)
    target2 = target2.at[1, :2].set(pad_idx)
    _check(logits2, target2, pad_idx, block_rows=16, chunk_rows=8)

    print("KERNEL_OK")
</pallas_src>

<mosaic_0001>
module attributes {stable_mosaic.version = 11 : i64} {
  func.func @_accuracy_kernel(%arg0: i32, %arg1: memref<16x1xi32, #tpu.memory_space<vmem>>, %arg2: memref<16x32xf32, #tpu.memory_space<vmem>>, %arg3: memref<1x2x128xi32, #tpu.memory_space<vmem>>) attributes {dimension_semantics = [#tpu.dimension_semantics<parallel>], iteration_bounds = array<i64: 1>, scalar_prefetch = 0 : i64, scratch_operands = 0 : i64, tpu.core_type = #tpu.core_type<tc>, window_params = [{transform_indices = @transform_0, window_bounds = array<i64: 16, 1>}, {transform_indices = @transform_1, window_bounds = array<i64: 16, 32>}, {transform_indices = @transform_2, window_bounds = array<i64: 1, 2, 128>}]} {
    %c16_i32 = arith.constant 16 : i32
    %0 = arith.muli %arg0, %c16_i32 : i32
    %1 = tpu.iota {dimensions = array<i32: 1>} : vector<1x32xi32>
    %2 = tpu.iota {dimensions = array<i32: 0>} : vector<16x1xi32>
    %c0_i32 = arith.constant 0 : i32
    %c0_i32_0 = arith.constant 0 : i32
    %c0_i32_1 = arith.constant 0 : i32
    %c16_i32_2 = arith.constant 16 : i32
    %3 = arith.muli %c0_i32_1, %c16_i32_2 : i32
    %4 = tpu.assume_multiple %3, 16 : i32
    %5 = arith.index_cast %4 : i32 to index
    %c0 = arith.constant 0 : index
    %6 = vector.load %arg2[%5, %c0] : memref<16x32xf32, #tpu.memory_space<vmem>>, vector<16x32xf32>
    %7 = arith.index_cast %4 : i32 to index
    %c0_3 = arith.constant 0 : index
    %8 = vector.load %arg1[%7, %c0_3] : memref<16x1xi32, #tpu.memory_space<vmem>>, vector<16x1xi32>
    %cst = arith.constant dense<0xFF800000> : vector<16xf32>
    %9 = vector.multi_reduction <maximumf>, %6, %cst [1] : vector<16x32xf32> to vector<16xf32>
    %10 = vector.shape_cast %9 : vector<16xf32> to vector<16x1xf32>
    %11 = vector.broadcast %10 : vector<16x1xf32> to vector<16x32xf32>
    %12 = arith.cmpf oeq, %6, %11 : vector<16x32xf32>
    %c32_i32 = arith.constant 32 : i32
    %13 = vector.shape_cast %1 : vector<1x32xi32> to vector<1x32xi32>
    %14 = vector.broadcast %13 : vector<1x32xi32> to vector<16x32xi32>
    %15 = vector.broadcast %c32_i32 : i32 to vector<16x32xi32>
    %16 = arith.select %12, %14, %15 : vector<16x32xi1>, vector<16x32xi32>
    %cst_4 = arith.constant dense<2147483647> : vector<16xi32>
    %17 = vector.multi_reduction <minsi>, %16, %cst_4 [1] : vector<16x32xi32> to vector<16xi32>
    %18 = vector.shape_cast %17 : vector<16xi32> to vector<16x1xi32>
    %19 = arith.addi %0, %4 : i32
    %20 = vector.broadcast %19 : i32 to vector<16x1xi32>
    %21 = arith.addi %20, %2 : vector<16x1xi32>
    %c16_i32_5 = arith.constant 16 : i32
    %22 = vector.broadcast %c16_i32_5 : i32 to vector<16x1xi32>
    %23 = arith.cmpi slt, %21, %22 : vector<16x1xi32>
    %c0_i32_6 = arith.constant 0 : i32
    %24 = vector.broadcast %c0_i32_6 : i32 to vector<16x1xi32>
    %25 = arith.cmpi ne, %8, %24 : vector<16x1xi32>
    %26 = arith.andi %25, %23 : vector<16x1xi1>
    %27 = arith.cmpi eq, %18, %8 : vector<16x1xi32>
    %28 = arith.andi %27, %26 : vector<16x1xi1>
    %29 = arith.extui %28 : vector<16x1xi1> to vector<16x1xi32>
    %30 = vector.shape_cast %29 : vector<16x1xi32> to vector<1x16x1xi32>
    %cst_7 = arith.constant dense<0> : vector<1xi32>
    %31 = vector.multi_reduction <add>, %30, %cst_7 [1, 2] : vector<1x16x1xi32> to vector<1xi32>
    %32 = vector.shape_cast %31 : vector<1xi32> to vector<1x1x1xi32>
    %33 = vector.extract %32[0, 0, 0] : i32 from vector<1x1x1xi32>
    %34 = arith.addi %c0_i32, %33 : i32
    %35 = arith.extui %26 : vector<16x1xi1> to vector<16x1xi32>
    %36 = vector.shape_cast %35 : vector<16x1xi32> to vector<1x16x1xi32>
    %cst_8 = arith.constant dense<0> : vector<1xi32>
    %37 = vector.multi_reduction <add>, %36, %cst_8 [1, 2] : vector<1x16x1xi32> to vector<1xi32>
    %38 = vector.shape_cast %37 : vector<1xi32> to vector<1x1x1xi32>
    %39 = vector.extract %38[0, 0, 0] : i32 from vector<1x1x1xi32>
    %40 = arith.addi %c0_i32_0, %39 : i32
    %c1_i32 = arith.constant 1 : i32
    %41 = vector.broadcast %34 : i32 to vector<1x1x128xi32>
    %c0_9 = arith.constant 0 : index
    %c0_10 = arith.constant 0 : index
    %c0_11 = arith.constant 0 : index
    %42 = vector.load %arg3[%c0_9, %c0_10, %c0_11] : memref<1x2x128xi32, #tpu.memory_space<vmem>>, vector<1x1x128xi32>
    tpu.vector_store %arg3[%c0_9, %c0_10, %c0_11], %41 {strides = array<i32>} : memref<1x2x128xi32, #tpu.memory_space<vmem>>, vector<1x1x128xi32>,
    %43 = vector.broadcast %40 : i32 to vector<1x1x128xi32>
    %c0_12 = arith.constant 0 : index
    %c1 = arith.constant 1 : index
    %c0_13 = arith.constant 0 : index
    %44 = vector.load %arg3[%c0_12, %c1, %c0_13] : memref<1x2x128xi32, #tpu.memory_space<vmem>>, vector<1x1x128xi32>
    tpu.vector_store %arg3[%c0_12, %c1, %c0_13], %43 {strides = array<i32>} : memref<1x2x128xi32, #tpu.memory_space<vmem>>, vector<1x1x128xi32>,
    return
  }
  func.func @transform_0(%arg0: i32) -> (i32, i32) {
    %c0_i32 = arith.constant 0 : i32
    %c0_i32_0 = arith.constant 0 : i32
    return %arg0, %c0_i32 : i32, i32
  }
  func.func @transform_1(%arg0: i32) -> (i32, i32) {
    %c0_i32 = arith.constant 0 : i32
    %c0_i32_0 = arith.constant 0 : i32
    return %arg0, %c0_i32 : i32, i32
  }
  func.func @transform_2(%arg0: i32) -> (i32, i32, i32) {
    %c0_i32 = arith.constant 0 : i32
    %c0_i32_0 = arith.constant 0 : i32
    %c0_i32_1 = arith.constant 0 : i32
    return %arg0, %c0_i32, %c0_i32_0 : i32, i32, i32
  }
}

</mosaic_0001>

<llo_original>
// kernel: tpu_custom_call.1
$region0: #{tpu_custom_call.1}
  #allocation0 [shape = 'u32[]', space=smem, size = 0x4, offset = 0x4, fixed_abs, tag = 'smem constant byte address 0x4 - core index']
  #allocation1 [shape = 'u32[144,128]{1,0:T(1,128)}', space=vmem, size = 0x12000, scoped, tag = 'internal scratch']
  %s0 = inlined_call_operand.vmem [shape: s32[16,1], index: 0, kind: input, shape index: {}]
  %s1 = inlined_call_operand.vmem [shape: f32[16,32], index: 1, kind: input, shape index: {}]
  %s2 = inlined_call_operand.hbm [shape: s32[1,2,128], index: 2, kind: output, shape index: {}]
  %s3 = sld [smem:[#allocation0]]
  $region18: #{tpu_custom_call.1} parent=0
    _
  %s5 = ssub.s32 1, %s3
  %s6 = scalar_select 0, %s5, %s3
  $region1: #{tpu_custom_call.1} parent=0
    #allocation2 [shape = 'u8[1024]{0}', space=vmem, size = 0x400, scoped, tag = 'output window, operand 0, single buffered']
    #allocation3 [shape = 's32[1]{0}', space=sflag, size = 0x4, scoped, tag = 'scoped memory for tpu_custom_call.1']
    %7 = vsyncpa [#allocation3], 0
    // Predicated region
    $region2: #{tpu_custom_call.1} parent=1 // pred_check
      _
    $region3: #{tpu_custom_call.1} parent=1 // pred_check_branch
      %9 = sbr.rel (0) target = $region5
    $region4: #{tpu_custom_call.1} parent=1 // pred_region
      _
    $region5: #{tpu_custom_call.1} parent=1 // pred_fallthru
      _
    // Predicated region
    $region6: #{tpu_custom_call.1} parent=1 // pred_check
      _
    $region7: #{tpu_custom_call.1} parent=1 // pred_check_branch
      %11 = sbr.rel (0) target = $region9
    $region8: #{tpu_custom_call.1} parent=1 // pred_region
      _
    $region9: #{tpu_custom_call.1} parent=1 // pred_fallthru
      _
    %s12 = smul.u32 0, 16
    %v13 = vlaneseq
    %v14 = vand.u32 %v13, 127
    %v15 = vlaneseq
    %v16 = vshrl.u32 %v15, 7
    %v17 = vadd.s32 %v16, 8
    %v18 = vld [vmem:[%s1] sm:$0xff]
    %v19 = vld [vmem:[%s1 + $0x8] sm:$0xff]
    %v20 = vld [vmem:[%s0] sm:$0xff]
    %v21 = vld [vmem:[%s0 + $0x8] sm:$0xff]
    %vm22 = vcmask 261120
    %v23 = vsel %vm22, %v18, -inf
    %24 = vmax.xlane.f32.xlu0 %v23
    %v25 = vpop.xlane.xlu0 %24
    %v26 = vsel %vm22, %v19, -inf
    %27 = vmax.xlane.f32.xlu0 %v26
    %v28 = vpop.xlane.xlu0 %27
    %vm29 = vcmp.eq.f32.partialorder %v18, %v25
    %vm30 = vcmp.eq.f32.partialorder %v19, %v28
    %v31 = vsel %vm29, %v14, 32
    %v32 = vsel %vm30, %v14, 32
    %v33 = vsel %vm22, %v31, 2147483647
    %v34 = vand.u32 %v33, 65535
    %v35 = vshra.s32 %v33, 16
    %v36 = vcvt.s32.f32 %v34
    %v37 = vcvt.s32.f32 %v35
    %38 = vmin.xlane.f32.xlu0 %v37
    %v39 = vpop.xlane.xlu0 %38
    %vm40 = vcmp.eq.f32.partialorder %v37, %v39
    %v41 = vsel %vm40, %v36, inf
    %42 = vmin.xlane.f32.xlu0 %v41
    %v43 = vpop.xlane.xlu0 %42
    %v44 = vcvt.f32.s32 %v43
    %v45 = vcvt.f32.s32 %v39
    %v46 = vshll.u32 %v45, 16
    %v47 = vadd.s32 %v46, %v44
    %v48 = vsel %vm22, %v32, 2147483647
    %v49 = vand.u32 %v48, 65535
    %v50 = vshra.s32 %v48, 16
    %v51 = vcvt.s32.f32 %v49
    %v52 = vcvt.s32.f32 %v50
    %53 = vmin.xlane.f32.xlu0 %v52
    %v54 = vpop.xlane.xlu0 %53
    %vm55 = vcmp.eq.f32.partialorder %v52, %v54
    %v56 = vsel %vm55, %v51, inf
    %57 = vmin.xlane.f32.xlu0 %v56
    %v58 = vpop.xlane.xlu0 %57
    %v59 = vcvt.f32.s32 %v58
    %v60 = vcvt.f32.s32 %v54
    %v61 = vshll.u32 %v60, 16
    %v62 = vadd.s32 %v61, %v59
    %s63 = sadd.s32 %s12, 0
    %v64 = vstv %s63
    %v65 = vadd.s32 %v64, %v16
    %v66 = vadd.s32 %v64, %v17
    %vm67 = vcmp.lt.s32.totalorder %v65, 16
    %vm68 = vcmp.lt.s32.totalorder %v66, 16
    %vm69 = vcmp.ne.s32.totalorder %v20, 0
    %vm70 = vcmp.ne.s32.totalorder %v21, 0
    %vm71 = vmand %vm69, %vm67
    %vm72 = vmand %vm70, %vm68
    %vm73 = vcmp.eq.s32.totalorder %v47, %v20
    %vm74 = vcmp.eq.s32.totalorder %v62, %v21
    %vm75 = vmand %vm73, %vm71
    %vm76 = vmand %vm74, %vm72
    %v77 = vsel %vm75, 1, 0
    %v78 = vsel %vm76, 1, 0
    %vm79 = vcmask 7168
    %v80 = vsel %vm79, %v77, 0
    %v81 = vsel %vm79, %v78, 0
    %v82 = vadd.s32 %v80, %v81
    %v83 = vand.u32 %v82, 65535
    %v84 = vshrl.u32 %v82, 16
    %v85 = vcvt.s32.f32 %v83
    %v86 = vcvt.s32.f32 %v84
    %87 = vadd.xlane.f32.xlu0 %v85
    %v88 = vpop.xlane.xlu0 %87
    %89 = vadd.xlane.f32.xlu0 %v86
    %v90 = vpop.xlane.xlu0 %89
    %v91 = vcvt.f32.s32 %v88
    %v92 = vcvt.f32.s32 %v90
    %v93 = vshll.u32 %v92, 16
    %v94 = vadd.s32 %v93, %v91
    %v95 = vrot.slane %v94, 4
    %v96 = vadd.s32 %v94, %v95
    %v97 = vrot.slane %v96, 2
    %v98 = vadd.s32 %v96, %v97
    %v99 = vrot.slane %v98, 1
    %v100 = vadd.s32 %v98, %v99
    %s101 = vtos %v100
    %v102 = vsel %vm71, 1, 0
    %v103 = vsel %vm72, 1, 0
    %v104 = vsel %vm79, %v102, 0
    %v105 = vsel %vm79, %v103, 0
    %v106 = vadd.s32 %v104, %v105
    %v107 = vand.u32 %v106, 65535
    %v108 = vshrl.u32 %v106, 16
    %v109 = vcvt.s32.f32 %v107
    %v110 = vcvt.s32.f32 %v108
    %111 = vadd.xlane.f32.xlu0 %v109
    %v112 = vpop.xlane.xlu0 %111
    %113 = vadd.xlane.f32.xlu0 %v110
    %v114 = vpop.xlane.xlu0 %113
    %v115 = vcvt.f32.s32 %v112
    %v116 = vcvt.f32.s32 %v114
    %v117 = vshll.u32 %v116, 16
    %v118 = vadd.s32 %v117, %v115
    %v119 = vrot.slane %v118, 4
    %v120 = vadd.s32 %v118, %v119
    %v121 = vrot.slane %v120, 2
    %v122 = vadd.s32 %v120, %v121
    %v123 = vrot.slane %v122, 1
    %v124 = vadd.s32 %v122, %v123
    %s125 = vtos %v124
    %v126 = vstv %s101
    %127 = vst [vmem:[#allocation2] sm:$0x1] %v126
    %v128 = vstv %s125
    %129 = vst [vmem:[#allocation2 + $0x1] sm:$0x1] %v128
    // Predicated region
    $region10: #{tpu_custom_call.1} parent=1 // pred_check
      _
    $region11: #{tpu_custom_call.1} parent=1 // pred_check_branch
      %131 = sbr.rel (0) target = $region13
    $region12: #{tpu_custom_call.1} parent=1 // pred_region
      %s133 = ssub.s32 32, 32
      %134 = vsyncadd [#allocation3], %s133
      %s136 = sshll.u32 [#allocation2], 4
      %s137 = int_to_ptr.vmem [resolvable:$true] %s136
      %139 = dma.vmem_to_hbm [thread:$0]  %s137, 32, %s2, [#allocation3]
    $region13: #{tpu_custom_call.1} parent=1 // pred_fallthru
      _
    // Predicated region
    $region14: #{tpu_custom_call.1} parent=1 // pred_check
      _
    $region15: #{tpu_custom_call.1} parent=1 // pred_check_branch
      %141 = sbr.rel (0) target = $region17
    $region16: #{tpu_custom_call.1} parent=1 // pred_region
      %142 = dma.done [#allocation3], 32
    $region17: #{tpu_custom_call.1} parent=1 // pred_fallthru
      _
    %143 = vsyncpa [#allocation3], 1

</llo_original>
